<compile_context>
chip_gen: v7x
topology: tpu7x:2x2x1
jax: 0.10.0
libtpu: 0.0.40
codegen_flags: <defaults>
</compile_context>

<pallas_src>
import functools

import jax
import jax.numpy as jnp
import numpy as np
from jax.experimental import pallas as pl
from jax.experimental.pallas import tpu as pltpu


def _round_up(x, m):
    return ((x + m - 1) // m) * m


def gaussian_policy_kernel(x_ref,
                           w0_ref, b0_ref,
                           w1_ref, b1_ref,
                           w2_ref, b2_ref,
                           out_ref,
                           *, d3, tanh_in_bf16):
    wdt = w0_ref.dtype  # bf16 (default, fast path) or f32; dots accumulate in f32 either way.
    # Activation dtype: bf16 tanh only if requested AND weights are bf16 (v6e/v7x only).
    act_dt = jnp.bfloat16 if (tanh_in_bf16 and wdt == jnp.bfloat16) else jnp.float32

    x = x_ref[...].astype(wdt)

    # shared first linear + Tanh (used by both branches)
    h_pre = jnp.dot(x, w0_ref[...], preferred_element_type=jnp.float32) + b0_ref[...]
    h = jnp.tanh(h_pre.astype(act_dt))

    # fused stage 1: [hm | hs] = tanh(h @ [w1m | w1s] + [b1m | b1s])   (B, 2*D2)
    h12_pre = (jnp.dot(h.astype(wdt), w1_ref[...], preferred_element_type=jnp.float32)
               + b1_ref[...])
    h12 = jnp.tanh(h12_pre.astype(act_dt))

    # fused stage 2: [mean_pre | logstd_pre] = h12 @ blockdiag(w2m, w2s) + [b2m | b2s]
    y = (jnp.dot(h12.astype(wdt), w2_ref[...], preferred_element_type=jnp.float32)
         + b2_ref[...])

    # [mean | std] in one lane-dense store: exp only on the log_std half.
    lane = jax.lax.broadcasted_iota(jnp.int32, y.shape, 1)
    out_ref[...] = jnp.where(lane < d3, y, jnp.exp(y)).astype(out_ref.dtype)


def fuse_params(params, *, use_bf16_mxu=True):
    """Host-side weight prep: concat stage-1 weights, block-diag stage-2 weights.

    Call ONCE at policy construction (not per env step) and reuse the returned dict —
    the concat / zeros / scatter / casts are several extra dispatches + HBM traffic.
    bf16 weights (default) are the fast MXU path; pass use_bf16_mxu=False for a
    bit-accurate f32 reference path (~3x more MXU passes).
    """
    D1, D2 = params["w1m"].shape
    D3 = params["w2m"].shape[1]

    w1_cat = jnp.concatenate([params["w1m"], params["w1s"]], axis=1)   # (D1, 2*D2)
    b1_cat = jnp.concatenate([params["b1m"], params["b1s"]], axis=1)   # (1, 2*D2)

    w2_blk = jnp.zeros((2 * D2, 2 * D3), jnp.float32)
    w2_blk = w2_blk.at[:D2, :D3].set(params["w2m"]).at[D2:, D3:].set(params["w2s"])
    b2_cat = jnp.concatenate([params["b2m"], params["b2s"]], axis=1)   # (1, 2*D3)

    wdt = jnp.bfloat16 if use_bf16_mxu else jnp.float32
    return dict(
        w0=params["w0"].astype(wdt), b0=params["b0"],      # biases stay f32 (added post-acc)
        w1=w1_cat.astype(wdt), b1=b1_cat,
        w2=w2_blk.astype(wdt), b2=b2_cat,
        d3=D3,
    )


# v7x has 64 MiB physical VMEM (32 MiB scoped default); keep tile-derived VMEM well under.
_MAX_BLOCK_B = 8192


def gaussian_policy_forward(state, fused_params, *, block_b=4096, tanh_in_bf16=False):
    """state: (B, D0) f32.  fused_params: output of fuse_params() (created once).

    Returns (mean, std), each (B, D3) f32.
    """
    B, D0 = state.shape
    fp = fused_params
    D1 = fp["w0"].shape[1]
    D2 = fp["w1"].shape[1] // 2
    D3 = int(fp["d3"])

    # Batch tile: multiple of 8 sublanes, capped for VMEM (v7x), and capped at
    # round_up(cdiv(B, 2), 8) so moderate batches still produce >=2 grid programs
    # (so the "parallel" grid axis can shard across both v7x TensorCores).
    bb = min(block_b, _MAX_BLOCK_B)
    bb = min(bb, max(8, _round_up(pl.cdiv(B, 2), 8)))
    bb = _round_up(bb, 8)

    # Minimal sublane padding only (multiple of 8); the last grid block may be partial —
    # Pallas masks the out-of-bounds rows, and we slice the output back to [:B].
    B8 = _round_up(B, 8)
    if B8 != B:
        state = jnp.pad(state, ((0, B8 - B), (0, 0)))
    grid = (pl.cdiv(B8, bb),)

    def resident(a):
        # weights/biases: full-array block, VMEM-resident across the batch grid
        return pl.BlockSpec(a.shape, lambda i: (0, 0))

    weight_args = (fp["w0"], fp["b0"], fp["w1"], fp["b1"], fp["w2"], fp["b2"])
    weight_bytes = sum(int(np.prod(a.shape)) * a.dtype.itemsize for a in weight_args)

    cost = pl.CostEstimate(
        flops=2 * B8 * (D0 * D1 + D1 * (2 * D2) + (2 * D2) * (2 * D3)),
        transcendentals=B8 * (D1 + 2 * D2 + D3),
        bytes_accessed=B8 * 4 * (D0 + 2 * D3) + weight_bytes,
    )

    out = pl.pallas_call(
        functools.partial(gaussian_policy_kernel, d3=D3, tanh_in_bf16=tanh_in_bf16),
        out_shape=jax.ShapeDtypeStruct((B8, 2 * D3), jnp.float32),
        grid=grid,
        in_specs=[pl.BlockSpec((bb, D0), lambda i: (i, 0))]
                 + [resident(a) for a in weight_args],
        out_specs=pl.BlockSpec((bb, 2 * D3), lambda i: (i, 0)),
        compiler_params=pltpu.CompilerParams(
            dimension_semantics=("parallel",)),
        cost_estimate=cost,
    )(state, *weight_args)

    out = out[:B]
    mean = out[:, :D3]
    std = out[:, D3:]
    return mean, std


def init_params(key, layer_dims):
    """Deterministic PyTorch-Linear-style init (uniform +-1/sqrt(fan_in)).
    Weights stored pre-transposed as (in, out); biases as (1, out)."""
    D0, D1, D2, D3 = layer_dims
    ks = jax.random.split(key, 10)

    def lin(kw, kb, din, dout):
        bound = 1.0 / np.sqrt(din)
        w = jax.random.uniform(kw, (din, dout), jnp.float32, -bound, bound)
        b = jax.random.uniform(kb, (1, dout), jnp.float32, -bound, bound)
        return w, b

    w0, b0 = lin(ks[0], ks[1], D0, D1)          # shared layer
    w1m, b1m = lin(ks[2], ks[3], D1, D2)
    w2m, b2m = lin(ks[4], ks[5], D2, D3)
    w1s, b1s = lin(ks[6], ks[7], D1, D2)
    w2s, b2s = lin(ks[8], ks[9], D2, D3)
    return dict(w0=w0, b0=b0,
                w1m=w1m, b1m=b1m, w2m=w2m, b2m=b2m,
                w1s=w1s, b1s=b1s, w2s=w2s, b2s=b2s)


def reference_forward(state, p):
    h = jnp.tanh(state @ p["w0"] + p["b0"])
    mean = jnp.tanh(h @ p["w1m"] + p["b1m"]) @ p["w2m"] + p["b2m"]
    log_std = jnp.tanh(h @ p["w1s"] + p["b1s"]) @ p["w2s"] + p["b2s"]
    return mean, jnp.exp(log_std)


if __name__ == "__main__":
    layer_dims = [32, 64, 64, 8]   # [obs_dim, hidden, hidden, action_dim]
    batch = 8

    key = jax.random.PRNGKey(0)
    k_state, k_params = jax.random.split(key)
    state = jax.random.normal(k_state, (batch, layer_dims[0]), jnp.float32)
    params = init_params(k_params, layer_dims)

    # Fuse ONCE at "policy construction" (hot RL loop just calls gaussian_policy_forward).
    fp_bf16 = fuse_params(params, use_bf16_mxu=True)    # default fast path
    fp_f32 = fuse_params(params, use_bf16_mxu=False)    # bit-accurate reference path

    ref_mean, ref_std = reference_forward(state, params)

    # bf16 MXU (default): relaxed tolerances.
    mean, std = jax.block_until_ready(gaussian_policy_forward(state, fp_bf16))
    np.testing.assert_allclose(np.asarray(mean), np.asarray(ref_mean), rtol=3e-2, atol=3e-2)
    np.testing.assert_allclose(np.asarray(std), np.asarray(ref_std), rtol=3e-2, atol=3e-2)

    # f32 path: tight tolerances.
    mean32, std32 = jax.block_until_ready(gaussian_policy_forward(state, fp_f32))
    np.testing.assert_allclose(np.asarray(mean32), np.asarray(ref_mean), rtol=1e-5, atol=1e-5)
    np.testing.assert_allclose(np.asarray(std32), np.asarray(ref_std), rtol=1e-5, atol=1e-5)

    # Non-multiple-of-8 batch with a multi-program grid and a PARTIAL last block
    # (B=37 -> pad to 40, bb=16 -> grid=(3,), last block half out-of-bounds).
    state_big = jax.random.normal(k_state, (37, layer_dims[0]), jnp.float32)
    ref_mean_b, ref_std_b = reference_forward(state_big, params)
    mean_b, std_b = jax.block_until_ready(
        gaussian_policy_forward(state_big, fp_f32, block_b=16))
    np.testing.assert_allclose(np.asarray(mean_b), np.asarray(ref_mean_b), rtol=1e-5, atol=1e-5)
    np.testing.assert_allclose(np.asarray(std_b), np.asarray(ref_std_b), rtol=1e-5, atol=1e-5)

    # Same shapes through the bf16 default path (partial-block + multi-core grid exercise).
    mean_bb, std_bb = jax.block_until_ready(
        gaussian_policy_forward(state_big, fp_bf16, block_b=16))
    np.testing.assert_allclose(np.asarray(mean_bb), np.asarray(ref_mean_b), rtol=3e-2, atol=3e-2)
    np.testing.assert_allclose(np.asarray(std_bb), np.asarray(ref_std_b), rtol=3e-2, atol=3e-2)

    print("KERNEL_OK")
</pallas_src>

<mosaic_0001>
module attributes {stable_mosaic.version = 11 : i64} {
  func.func @gaussian_policy_kernel(%arg0: i32, %arg1: memref<8x32xf32, #tpu.memory_space<vmem>>, %arg2: memref<32x64xbf16, #tpu.memory_space<vmem>>, %arg3: memref<1x64xf32, #tpu.memory_space<vmem>>, %arg4: memref<64x128xbf16, #tpu.memory_space<vmem>>, %arg5: memref<1x128xf32, #tpu.memory_space<vmem>>, %arg6: memref<128x16xbf16, #tpu.memory_space<vmem>>, %arg7: memref<1x16xf32, #tpu.memory_space<vmem>>, %arg8: memref<8x16xf32, #tpu.memory_space<vmem>>) attributes {dimension_semantics = [#tpu.dimension_semantics<parallel>], iteration_bounds = array<i64: 1>, scalar_prefetch = 0 : i64, scratch_operands = 0 : i64, tpu.core_type = #tpu.core_type<tc>, window_params = [{transform_indices = @transform_0, window_bounds = array<i64: 8, 32>}, {pipeline_mode = #tpu.pipeline_mode<synchronous>, transform_indices = @transform_1, window_bounds = array<i64: 32, 64>}, {pipeline_mode = #tpu.pipeline_mode<synchronous>, transform_indices = @transform_2, window_bounds = array<i64: 1, 64>}, {pipeline_mode = #tpu.pipeline_mode<synchronous>, transform_indices = @transform_3, window_bounds = array<i64: 64, 128>}, {pipeline_mode = #tpu.pipeline_mode<synchronous>, transform_indices = @transform_4, window_bounds = array<i64: 1, 128>}, {pipeline_mode = #tpu.pipeline_mode<synchronous>, transform_indices = @transform_5, window_bounds = array<i64: 128, 16>}, {pipeline_mode = #tpu.pipeline_mode<synchronous>, transform_indices = @transform_6, window_bounds = array<i64: 1, 16>}, {transform_indices = @transform_7, window_bounds = array<i64: 8, 16>}]} {
    %c0 = arith.constant 0 : index
    %c0_0 = arith.constant 0 : index
    %0 = vector.load %arg1[%c0, %c0_0] : memref<8x32xf32, #tpu.memory_space<vmem>>, vector<8x32xf32>
    %1 = arith.truncf %0 : vector<8x32xf32> to vector<8x32xbf16>
    %c0_1 = arith.constant 0 : index
    %c0_2 = arith.constant 0 : index
    %2 = vector.load %arg2[%c0_1, %c0_2] : memref<32x64xbf16, #tpu.memory_space<vmem>>, vector<32x64xbf16>
    %cst = arith.constant dense<0.000000e+00> : vector<8x64xf32>
    %3 = tpu.matmul %1, %2, %cst {dimension_numbers = #tpu.dot_dimension_numbers<[1], [0], [0], [1], [0, 0, 1, 1], [], []>} : vector<8x32xbf16>, vector<32x64xbf16>, vector<8x64xf32> -> vector<8x64xf32>
    %c0_3 = arith.constant 0 : index
    %c0_4 = arith.constant 0 : index
    %4 = vector.load %arg3[%c0_3, %c0_4] : memref<1x64xf32, #tpu.memory_space<vmem>>, vector<1x64xf32>
    %5 = vector.broadcast %4 : vector<1x64xf32> to vector<8x64xf32>
    %6 = arith.addf %3, %5 : vector<8x64xf32>
    %7 = math.tanh %6 : vector<8x64xf32>
    %8 = arith.truncf %7 : vector<8x64xf32> to vector<8x64xbf16>
    %c0_5 = arith.constant 0 : index
    %c0_6 = arith.constant 0 : index
    %9 = vector.load %arg4[%c0_5, %c0_6] : memref<64x128xbf16, #tpu.memory_space<vmem>>, vector<64x128xbf16>
    %cst_7 = arith.constant dense<0.000000e+00> : vector<8x128xf32>
    %10 = tpu.matmul %8, %9, %cst_7 {dimension_numbers = #tpu.dot_dimension_numbers<[1], [0], [0], [1], [0, 0, 1, 1], [], []>} : vector<8x64xbf16>, vector<64x128xbf16>, vector<8x128xf32> -> vector<8x128xf32>
    %c0_8 = arith.constant 0 : index
    %c0_9 = arith.constant 0 : index
    %11 = vector.load %arg5[%c0_8, %c0_9] : memref<1x128xf32, #tpu.memory_space<vmem>>, vector<1x128xf32>
    %12 = vector.broadcast %11 : vector<1x128xf32> to vector<8x128xf32>
    %13 = arith.addf %10, %12 : vector<8x128xf32>
    %14 = math.tanh %13 : vector<8x128xf32>
    %15 = arith.truncf %14 : vector<8x128xf32> to vector<8x128xbf16>
    %c0_10 = arith.constant 0 : index
    %c0_11 = arith.constant 0 : index
    %16 = vector.load %arg6[%c0_10, %c0_11] : memref<128x16xbf16, #tpu.memory_space<vmem>>, vector<128x16xbf16>
    %cst_12 = arith.constant dense<0.000000e+00> : vector<8x16xf32>
    %17 = tpu.matmul %15, %16, %cst_12 {dimension_numbers = #tpu.dot_dimension_numbers<[1], [0], [0], [1], [0, 0, 1, 1], [], []>} : vector<8x128xbf16>, vector<128x16xbf16>, vector<8x16xf32> -> vector<8x16xf32>
    %c0_13 = arith.constant 0 : index
    %c0_14 = arith.constant 0 : index
    %18 = vector.load %arg7[%c0_13, %c0_14] : memref<1x16xf32, #tpu.memory_space<vmem>>, vector<1x16xf32>
    %19 = vector.broadcast %18 : vector<1x16xf32> to vector<8x16xf32>
    %20 = arith.addf %17, %19 : vector<8x16xf32>
    %21 = tpu.iota {dimensions = array<i32: 1>} : vector<8x16xi32>
    %c8_i32 = arith.constant 8 : i32
    %22 = vector.broadcast %c8_i32 : i32 to vector<8x16xi32>
    %23 = arith.cmpi slt, %21, %22 : vector<8x16xi32>
    %24 = math.exp %20 : vector<8x16xf32>
    %25 = arith.select %23, %20, %24 : vector<8x16xi1>, vector<8x16xf32>
    %c0_15 = arith.constant 0 : index
    %c0_16 = arith.constant 0 : index
    %26 = vector.load %arg8[%c0_15, %c0_16] : memref<8x16xf32, #tpu.memory_space<vmem>>, vector<8x16xf32>
    tpu.vector_store %arg8[%c0_15, %c0_16], %25 {strides = array<i32>} : memref<8x16xf32, #tpu.memory_space<vmem>>, vector<8x16xf32>,
    return
  }
  func.func @transform_0(%arg0: i32) -> (i32, i32) {
    %c0_i32 = arith.constant 0 : i32
    %c0_i32_0 = arith.constant 0 : i32
    return %arg0, %c0_i32 : i32, i32
  }
  func.func @transform_1(%arg0: i32) -> (i32, i32) {
    %c0_i32 = arith.constant 0 : i32
    %c0_i32_0 = arith.constant 0 : i32
    %c0_i32_1 = arith.constant 0 : i32
    return %c0_i32, %c0_i32_0 : i32, i32
  }
  func.func @transform_2(%arg0: i32) -> (i32, i32) {
    %c0_i32 = arith.constant 0 : i32
    %c0_i32_0 = arith.constant 0 : i32
    %c0_i32_1 = arith.constant 0 : i32
    return %c0_i32, %c0_i32_0 : i32, i32
  }
  func.func @transform_3(%arg0: i32) -> (i32, i32) {
    %c0_i32 = arith.constant 0 : i32
    %c0_i32_0 = arith.constant 0 : i32
    %c0_i32_1 = arith.constant 0 : i32
    return %c0_i32, %c0_i32_0 : i32, i32
  }
  func.func @transform_4(%arg0: i32) -> (i32, i32) {
    %c0_i32 = arith.constant 0 : i32
    %c0_i32_0 = arith.constant 0 : i32
    %c0_i32_1 = arith.constant 0 : i32
    return %c0_i32, %c0_i32_0 : i32, i32
  }
  func.func @transform_5(%arg0: i32) -> (i32, i32) {
    %c0_i32 = arith.constant 0 : i32
    %c0_i32_0 = arith.constant 0 : i32
    %c0_i32_1 = arith.constant 0 : i32
    return %c0_i32, %c0_i32_0 : i32, i32
  }
  func.func @transform_6(%arg0: i32) -> (i32, i32) {
    %c0_i32 = arith.constant 0 : i32
    %c0_i32_0 = arith.constant 0 : i32
    %c0_i32_1 = arith.constant 0 : i32
    return %c0_i32, %c0_i32_0 : i32, i32
  }
  func.func @transform_7(%arg0: i32) -> (i32, i32) {
    %c0_i32 = arith.constant 0 : i32
    %c0_i32_0 = arith.constant 0 : i32
    return %arg0, %c0_i32 : i32, i32
  }
}

</mosaic_0001>

<llo_original>
// kernel: tpu_custom_call.1
$region0: #{tpu_custom_call.1}
  #allocation0 [shape = 'u32[]', space=smem, size = 0x4, offset = 0x4, fixed_abs, tag = 'smem constant byte address 0x4 - core index']
  #allocation1 [shape = 'u32[144,128]{1,0:T(1,128)}', space=vmem, size = 0x12000, scoped, tag = 'internal scratch']
  %s0 = inlined_call_operand.vmem [shape: f32[8,32], index: 0, kind: input, shape index: {}]
  %s1 = inlined_call_operand.vmem [shape: bf16[32,64], index: 1, kind: input, shape index: {}]
  %s2 = inlined_call_operand.vmem [shape: f32[1,64], index: 2, kind: input, shape index: {}]
  %s3 = inlined_call_operand.vmem [shape: bf16[64,128], index: 3, kind: input, shape index: {}]
  %s4 = inlined_call_operand.vmem [shape: f32[1,128], index: 4, kind: input, shape index: {}]
  %s5 = inlined_call_operand.vmem [shape: bf16[128,16], index: 5, kind: input, shape index: {}]
  %s6 = inlined_call_operand.vmem [shape: f32[1,16], index: 6, kind: input, shape index: {}]
  %s7 = inlined_call_operand.hbm [shape: f32[8,16], index: 7, kind: output, shape index: {}]
  %s8 = sld [smem:[#allocation0]]
  $region38: #{tpu_custom_call.1} parent=0
    _
  %s10 = ssub.s32 1, %s8
  %s11 = scalar_select 0, %s10, %s8
  $region1: #{tpu_custom_call.1} parent=0
    #allocation2 [shape = 'u8[4096]{0}', space=vmem, size = 0x1000, scoped, tag = 'output window, operand 0, single buffered']
    #allocation3 [shape = 's32[1]{0}', space=sflag, size = 0x4, scoped, tag = 'scoped memory for tpu_custom_call.1']
    %12 = vsyncpa [#allocation3], 0
    // Predicated region
    $region2: #{tpu_custom_call.1} parent=1 // pred_check
      _
    $region3: #{tpu_custom_call.1} parent=1 // pred_check_branch
      %14 = sbr.rel (0) target = $region5
    $region4: #{tpu_custom_call.1} parent=1 // pred_region
      _
    $region5: #{tpu_custom_call.1} parent=1 // pred_fallthru
      _
    // Predicated region
    $region6: #{tpu_custom_call.1} parent=1 // pred_check
      _
    $region7: #{tpu_custom_call.1} parent=1 // pred_check_branch
      %16 = sbr.rel (0) target = $region9
    $region8: #{tpu_custom_call.1} parent=1 // pred_region
      _
    $region9: #{tpu_custom_call.1} parent=1 // pred_fallthru
      _
    // Predicated region
    $region10: #{tpu_custom_call.1} parent=1 // pred_check
      _
    $region11: #{tpu_custom_call.1} parent=1 // pred_check_branch
      %18 = sbr.rel (0) target = $region13
    $region12: #{tpu_custom_call.1} parent=1 // pred_region
      _
    $region13: #{tpu_custom_call.1} parent=1 // pred_fallthru
      _
    // Predicated region
    $region14: #{tpu_custom_call.1} parent=1 // pred_check
      _
    $region15: #{tpu_custom_call.1} parent=1 // pred_check_branch
      %20 = sbr.rel (0) target = $region17
    $region16: #{tpu_custom_call.1} parent=1 // pred_region
      _
    $region17: #{tpu_custom_call.1} parent=1 // pred_fallthru
      _
    // Predicated region
    $region18: #{tpu_custom_call.1} parent=1 // pred_check
      _
    $region19: #{tpu_custom_call.1} parent=1 // pred_check_branch
      %22 = sbr.rel (0) target = $region21
    $region20: #{tpu_custom_call.1} parent=1 // pred_region
      _
    $region21: #{tpu_custom_call.1} parent=1 // pred_fallthru
      _
    // Predicated region
    $region22: #{tpu_custom_call.1} parent=1 // pred_check
      _
    $region23: #{tpu_custom_call.1} parent=1 // pred_check_branch
      %24 = sbr.rel (0) target = $region25
    $region24: #{tpu_custom_call.1} parent=1 // pred_region
      _
    $region25: #{tpu_custom_call.1} parent=1 // pred_fallthru
      _
    // Predicated region
    $region26: #{tpu_custom_call.1} parent=1 // pred_check
      _
    $region27: #{tpu_custom_call.1} parent=1 // pred_check_branch
      %26 = sbr.rel (0) target = $region29
    $region28: #{tpu_custom_call.1} parent=1 // pred_region
      _
    $region29: #{tpu_custom_call.1} parent=1 // pred_fallthru
      _
    %v28 = vld [vmem:[%s0] sm:$0xff]
    %v29 = vpack.c.bf16 %v28, %v28
    %v30 = vld [vmem:[%s1] sm:$0xf]
    %v31 = vld [vmem:[%s1 + $0x4] sm:$0xf]
    %v32 = vld [vmem:[%s1 + $0x8] sm:$0xf]
    %v33 = vld [vmem:[%s1 + $0xc] sm:$0xf]
    %v34 = vld [vmem:[%s2] sm:$0x1]
    %v36 = vlaneseq
    %v37 = vshrl.u32 %v36, 7
    %v38 = vsub.s32 0, %v37
    %v39 = vrot.slane %v34, %v38
    %v45 = vunpack.c.l.b16 %v30
    %v46 = vunpack.c.l.b16 %v31
    %v47 = vunpack.c.l.b16 %v32
    %v48 = vunpack.c.l.b16 %v33
    %v49 = vpack.c.b16 %v46, %v45
    %v50 = vpack.c.b16 %v48, %v47
    %vm53 = vcmask 261120
    %v55 = vsel %vm53, %v29, 0
    %57 = vmatprep.subr.bf16.mxu0 0
    %58 = vmatpush1.bf16.msra.mxu0 %v49
    %59 = vmatprep.subr.bf16.mxu0 0
    %60 = vmatpush1.bf16.msra.mxu0 %v50
    %61 = vmatprep.subr.bf16.mxu0 0
    %62 = vmatpush1.bf16.msra.mxu0 0
    %63 = vmatprep.subr.bf16.mxu0 0
    %64 = vmatpush1.bf16.msra.mxu0 0
    %65 = vmatprep.subr.bf16.mxu0 0
    %66 = vmatpush1.bf16.msra.mxu0 0
    %67 = vmatprep.subr.bf16.mxu0 0
    %68 = vmatpush1.bf16.msra.mxu0 0
    %69 = vmatprep.subr.bf16.mxu0 0
    %70 = vmatpush1.bf16.msra.mxu0 0
    %71 = vmatprep.subr.bf16.mxu0 0
    %72 = vmatpush1.bf16.msra.mxu0 0
    %73 = vmatprep.subr.bf16.mxu0 0
    %74 = vmatpush1.bf16.msra.mxu0 0
    %75 = vmatprep.subr.bf16.mxu0 0
    %76 = vmatpush1.bf16.msra.mxu0 0
    %77 = vmatprep.subr.bf16.mxu0 0
    %78 = vmatpush1.bf16.msra.mxu0 0
    %79 = vmatprep.subr.bf16.mxu0 0
    %80 = vmatpush1.bf16.msra.mxu0 0
    %81 = vmatprep.subr.bf16.mxu0 0
    %82 = vmatpush1.bf16.msra.mxu0 0
    %83 = vmatprep.subr.bf16.mxu0 0
    %84 = vmatpush1.bf16.msra.mxu0 0
    %85 = vmatprep.subr.bf16.mxu0 0
    %86 = vmatpush1.bf16.msra.mxu0 0
    %87 = vmatprep.subr.bf16.mxu0 0
    %88 = vmatpush1.bf16.msra.mxu0 0
    %89 = vmatprep.mubr.bf16.mxu0 0
    %90 = vmatmul.mubr.bf16.gmra.mrb[0].mxu0 %v55
    %v91 = vpop.f32.mrb[0].mxu0
    %v92 = vadd.f32 %v39, %v91
    %v93 = vpop.f32.mrb[0].mxu0
    %v94 = vpop.f32.mrb[0].mxu0
    %v95 = vpop.f32.mrb[0].mxu0
    %96 = vdwg.mxu0
    %v97 = vtanh.pop %v92
    %v98 = vpack.c.bf16 %v97, %v97
    %v99 = vld [vmem:[%s3] sm:$0xf]
    %v100 = vld [vmem:[%s3 + $0x4] sm:$0xf]
    %v101 = vld [vmem:[%s3 + $0x8] sm:$0xf]
    %v102 = vld [vmem:[%s3 + $0xc] sm:$0xf]
    %v103 = vld [vmem:[%s3 + $0x10] sm:$0xf]
    %v104 = vld [vmem:[%s3 + $0x14] sm:$0xf]
    %v105 = vld [vmem:[%s3 + $0x18] sm:$0xf]
    %v106 = vld [vmem:[%s3 + $0x1c] sm:$0xf]
    %v107 = vld [vmem:[%s4] sm:$0x1]
    %v109 = vlaneseq
    %v110 = vshrl.u32 %v109, 7
    %v111 = vsub.s32 0, %v110
    %v112 = vrot.slane %v107, %v111
    %v122 = vunpack.c.l.b16 %v99
    %v123 = vunpack.c.l.b16 %v100
    %v124 = vunpack.c.l.b16 %v101
    %v125 = vunpack.c.l.b16 %v102
    %v126 = vunpack.c.l.b16 %v103
    %v127 = vunpack.c.l.b16 %v104
    %v128 = vunpack.c.l.b16 %v105
    %v129 = vunpack.c.l.b16 %v106
    %v130 = vpack.c.b16 %v123, %v122
    %v131 = vpack.c.b16 %v125, %v124
    %v132 = vpack.c.b16 %v127, %v126
    %v133 = vpack.c.b16 %v129, %v128
    %vm138 = vcmask 523264
    %v140 = vsel %vm138, %v98, 0
    %142 = vmatprep.subr.bf16.mxu0 0
    %143 = vmatpush1.bf16.msra.mxu0 %v130
    %144 = vmatprep.subr.bf16.mxu0 0
    %145 = vmatpush1.bf16.msra.mxu0 %v131
    %146 = vmatprep.subr.bf16.mxu0 0
    %147 = vmatpush1.bf16.msra.mxu0 %v132
    %148 = vmatprep.subr.bf16.mxu0 0
    %149 = vmatpush1.bf16.msra.mxu0 %v133
    %150 = vmatprep.subr.bf16.mxu0 0
    %151 = vmatpush1.bf16.msra.mxu0 0
    %152 = vmatprep.subr.bf16.mxu0 0
    %153 = vmatpush1.bf16.msra.mxu0 0
    %154 = vmatprep.subr.bf16.mxu0 0
    %155 = vmatpush1.bf16.msra.mxu0 0
    %156 = vmatprep.subr.bf16.mxu0 0
    %157 = vmatpush1.bf16.msra.mxu0 0
    %158 = vmatprep.subr.bf16.mxu0 0
    %159 = vmatpush1.bf16.msra.mxu0 0
    %160 = vmatprep.subr.bf16.mxu0 0
    %161 = vmatpush1.bf16.msra.mxu0 0
    %162 = vmatprep.subr.bf16.mxu0 0
    %163 = vmatpush1.bf16.msra.mxu0 0
    %164 = vmatprep.subr.bf16.mxu0 0
    %165 = vmatpush1.bf16.msra.mxu0 0
    %166 = vmatprep.subr.bf16.mxu0 0
    %167 = vmatpush1.bf16.msra.mxu0 0
    %168 = vmatprep.subr.bf16.mxu0 0
    %169 = vmatpush1.bf16.msra.mxu0 0
    %170 = vmatprep.subr.bf16.mxu0 0
    %171 = vmatpush1.bf16.msra.mxu0 0
    %172 = vmatprep.subr.bf16.mxu0 0
    %173 = vmatpush1.bf16.msra.mxu0 0
    %174 = vmatprep.mubr.bf16.mxu0 0
    %175 = vmatmul.mubr.bf16.gmra.mrb[0].mxu0 %v140
    %v176 = vpop.f32.mrb[0].mxu0
    %v177 = vadd.f32 %v112, %v176
    %v178 = vpop.f32.mrb[0].mxu0
    %v179 = vpop.f32.mrb[0].mxu0
    %v180 = vpop.f32.mrb[0].mxu0
    %181 = vdwg.mxu0
    %v182 = vtanh.pop %v177
    %v183 = vpack.c.bf16 %v182, %v182
    %v184 = vld [vmem:[%s5] sm:$0xf]
    %v185 = vld [vmem:[%s5 + $0x4] sm:$0xf]
    %v186 = vld [vmem:[%s5 + $0x8] sm:$0xf]
    %v187 = vld [vmem:[%s5 + $0xc] sm:$0xf]
    %v188 = vld [vmem:[%s5 + $0x10] sm:$0xf]
    %v189 = vld [vmem:[%s5 + $0x14] sm:$0xf]
    %v190 = vld [vmem:[%s5 + $0x18] sm:$0xf]
    %v191 = vld [vmem:[%s5 + $0x1c] sm:$0xf]
    %v192 = vld [vmem:[%s5 + $0x20] sm:$0xf]
    %v193 = vld [vmem:[%s5 + $0x24] sm:$0xf]
    %v194 = vld [vmem:[%s5 + $0x28] sm:$0xf]
    %v195 = vld [vmem:[%s5 + $0x2c] sm:$0xf]
    %v196 = vld [vmem:[%s5 + $0x30] sm:$0xf]
    %v197 = vld [vmem:[%s5 + $0x34] sm:$0xf]
    %v198 = vld [vmem:[%s5 + $0x38] sm:$0xf]
    %v199 = vld [vmem:[%s5 + $0x3c] sm:$0xf]
    %v200 = vld [vmem:[%s6] sm:$0x1]
    %v202 = vlaneseq
    %v203 = vshrl.u32 %v202, 7
    %v204 = vsub.s32 0, %v203
    %v205 = vrot.slane %v200, %v204
    %v223 = vunpack.c.l.b16 %v184
    %v224 = vunpack.c.l.b16 %v185
    %v225 = vunpack.c.l.b16 %v186
    %v226 = vunpack.c.l.b16 %v187
    %v227 = vunpack.c.l.b16 %v188
    %v228 = vunpack.c.l.b16 %v189
    %v229 = vunpack.c.l.b16 %v190
    %v230 = vunpack.c.l.b16 %v191
    %v231 = vunpack.c.l.b16 %v192
    %v232 = vunpack.c.l.b16 %v193
    %v233 = vunpack.c.l.b16 %v194
    %v234 = vunpack.c.l.b16 %v195
    %v235 = vunpack.c.l.b16 %v196
    %v236 = vunpack.c.l.b16 %v197
    %v237 = vunpack.c.l.b16 %v198
    %v238 = vunpack.c.l.b16 %v199
    %v239 = vpack.c.b16 %v224, %v223
    %v240 = vpack.c.b16 %v226, %v225
    %v241 = vpack.c.b16 %v228, %v227
    %v242 = vpack.c.b16 %v230, %v229
    %v243 = vpack.c.b16 %v232, %v231
    %v244 = vpack.c.b16 %v234, %v233
    %v245 = vpack.c.b16 %v236, %v235
    %v246 = vpack.c.b16 %v238, %v237
    %255 = vmatprep.subr.bf16.mxu0 0
    %256 = vmatpush1.bf16.msra.mxu0 %v239
    %257 = vmatprep.subr.bf16.mxu0 0
    %258 = vmatpush1.bf16.msra.mxu0 %v240
    %259 = vmatprep.subr.bf16.mxu0 0
    %260 = vmatpush1.bf16.msra.mxu0 %v241
    %261 = vmatprep.subr.bf16.mxu0 0
    %262 = vmatpush1.bf16.msra.mxu0 %v242
    %263 = vmatprep.subr.bf16.mxu0 0
    %264 = vmatpush1.bf16.msra.mxu0 %v243
    %265 = vmatprep.subr.bf16.mxu0 0
    %266 = vmatpush1.bf16.msra.mxu0 %v244
    %267 = vmatprep.subr.bf16.mxu0 0
    %268 = vmatpush1.bf16.msra.mxu0 %v245
    %269 = vmatprep.subr.bf16.mxu0 0
    %270 = vmatpush1.bf16.msra.mxu0 %v246
    %271 = vmatprep.subr.bf16.mxu0 0
    %272 = vmatpush1.bf16.msra.mxu0 0
    %273 = vmatprep.subr.bf16.mxu0 0
    %274 = vmatpush1.bf16.msra.mxu0 0
    %275 = vmatprep.subr.bf16.mxu0 0
    %276 = vmatpush1.bf16.msra.mxu0 0
    %277 = vmatprep.subr.bf16.mxu0 0
    %278 = vmatpush1.bf16.msra.mxu0 0
    %279 = vmatprep.subr.bf16.mxu0 0
    %280 = vmatpush1.bf16.msra.mxu0 0
    %281 = vmatprep.subr.bf16.mxu0 0
    %282 = vmatpush1.bf16.msra.mxu0 0
    %283 = vmatprep.subr.bf16.mxu0 0
    %284 = vmatpush1.bf16.msra.mxu0 0
    %285 = vmatprep.subr.bf16.mxu0 0
    %286 = vmatpush1.bf16.msra.mxu0 0
    %287 = vmatprep.mubr.bf16.mxu0 0
    %288 = vmatmul.mubr.bf16.gmra.mrb[0].mxu0 %v183
    %v289 = vpop.f32.mrb[0].mxu0
    %v290 = vadd.f32 %v205, %v289
    %v291 = vpop.f32.mrb[0].mxu0
    %v292 = vpop.f32.mrb[0].mxu0
    %v293 = vpop.f32.mrb[0].mxu0
    %294 = vdwg.mxu0
    %v295 = vlaneseq
    %v296 = vand.u32 %v295, 127
    %vm297 = vcmp.lt.s32.totalorder %v296, 8
    %v298 = vmul.f32 %v290, 1.442695
    %v299 = vpow.pop %v298
    %v300 = vsel %vm297, %v290, %v299
    %vm301 = vcmask 130048
    %302 = vst.msk [vmem:[#allocation2] sm:$0xff] %vm301, %v300
    // Predicated region
    $region30: #{tpu_custom_call.1} parent=1 // pred_check
      _
    $region31: #{tpu_custom_call.1} parent=1 // pred_check_branch
      %304 = sbr.rel (0) target = $region33
    $region32: #{tpu_custom_call.1} parent=1 // pred_region
      %s306 = ssub.s32 128, 128
      %307 = vsyncadd [#allocation3], %s306
      %s309 = sshll.u32 [#allocation2], 4
      %s310 = int_to_ptr.vmem [resolvable:$true] %s309
      %312 = dma.vmem_to_hbm [thread:$0]  %s310, 128, %s7, [#allocation3]
    $region33: #{tpu_custom_call.1} parent=1 // pred_fallthru
      _
    // Predicated region
    $region34: #{tpu_custom_call.1} parent=1 // pred_check
      _
    $region35: #{tpu_custom_call.1} parent=1 // pred_check_branch
      %314 = sbr.rel (0) target = $region37
    $region36: #{tpu_custom_call.1} parent=1 // pred_region
      %315 = dma.done [#allocation3], 128
    $region37: #{tpu_custom_call.1} parent=1 // pred_fallthru
      _
    %316 = vsyncpa [#allocation3], 1

</llo_original>
